<compile_context>
chip_gen: v5e
topology: v5e:2x2
jax: 0.10.0
libtpu: 0.0.40
codegen_flags: <defaults>
</compile_context>

<pallas_src>
import math

import jax
import jax.numpy as jnp
from jax.experimental import pallas as pl
from jax.experimental.pallas import tpu as pltpu

N_TIME = 128           # n_time_embedding
HALF = N_TIME // 2
N_HIDDEN = 64          # n_hidden (logical)
N_IN = 3
N_OUT = 3

HP = 128               # hidden width padded to a full vreg lane width
OUT_PAD = 128          # output width of the in-VMEM matmul (store is sliced to N_OUT)
XT_COLS = N_IN + 1     # [x0 x1 x2 | t] folded into one input block


def _round_up(n, m):
    return ((n + m - 1) // m) * m


def dense_net_kernel(xt_ref, emb_ref,
                     w1_ref, fw_ref, fb_ref,
                     w2_ref, wo_ref, bo_ref,
                     out_ref):
    xt = xt_ref[...]                               # (tb, 4) f32 = [x | t]
    t = xt[:, N_IN:N_IN + 1]                       # (tb, 1)

    # Sinusoidal time embedding via a single full-width transcendental:
    # row 0 of emb = [freq | freq], row 1 = [0 | pi/2]  =>  sin(a + pi/2) = cos(a).
    ang = t * emb_ref[0:1, :] + emb_ref[1:2, :]    # (tb, 128)
    temb = jnp.sin(ang)

    # Fused FiLM projections for BOTH layers: one (128, 512) bf16 matmul.
    # Columns: [gamma1 | beta1 | gamma2 | beta2], each padded to 128 lanes.
    f12 = jnp.dot(temb.astype(jnp.bfloat16), fw_ref[...],
                  preferred_element_type=jnp.float32) + fb_ref[...]            # (tb, 512)

    # ---- DenseLayer 1: Linear(3->64, no bias) -> FiLM -> ReLU (padded to 128 lanes) ----
    h = jnp.dot(xt.astype(jnp.bfloat16), w1_ref[...],
                preferred_element_type=jnp.float32)                            # (tb, HP)
    h = jnp.maximum(f12[:, 0 * HP:1 * HP] * h + f12[:, 1 * HP:2 * HP], 0.0)

    # ---- DenseLayer 2: Linear(64->64, no bias) -> FiLM -> ReLU ----
    h = jnp.dot(h.astype(jnp.bfloat16), w2_ref[...],
                preferred_element_type=jnp.float32)
    h = jnp.maximum(f12[:, 2 * HP:3 * HP] * h + f12[:, 3 * HP:4 * HP], 0.0)

    # ---- output Linear(64->3, with bias): 128-lane matmul in VMEM, narrow (tb, 3) store ----
    o = jnp.dot(h.astype(jnp.bfloat16), wo_ref[...],
                preferred_element_type=jnp.float32) + bo_ref[...]              # (tb, 128)
    out_ref[...] = o[:, :N_OUT].astype(out_ref.dtype)


def init_params(key):
    """Deterministic synthetic parameters (PyTorch default-style uniform init)."""
    ks = jax.random.split(key, 11)

    def lin(k, fan_in, fan_out):
        bound = 1.0 / math.sqrt(fan_in)
        return jax.random.uniform(k, (fan_in, fan_out), jnp.float32, -bound, bound)

    def bias(k, fan_in, fan_out):
        bound = 1.0 / math.sqrt(fan_in)
        return jax.random.uniform(k, (1, fan_out), jnp.float32, -bound, bound)

    # sinusoidal embedding frequencies (constant, derived from dim)
    emb_scale = math.log(10000.0) / (HALF - 1)
    freq = jnp.exp(-emb_scale * jnp.arange(HALF, dtype=jnp.float32)).reshape(1, HALF)

    return {
        "freq": freq,
        # layer 1
        "w1": lin(ks[0], N_IN, N_HIDDEN),
        "g1w": lin(ks[1], N_TIME, N_HIDDEN), "g1b": bias(ks[2], N_TIME, N_HIDDEN),
        "b1w": lin(ks[3], N_TIME, N_HIDDEN), "b1b": bias(ks[4], N_TIME, N_HIDDEN),
        # layer 2
        "w2": lin(ks[5], N_HIDDEN, N_HIDDEN),
        "g2w": lin(ks[6], N_TIME, N_HIDDEN), "g2b": bias(ks[7], N_TIME, N_HIDDEN),
        "b2w": lin(ks[8], N_TIME, N_HIDDEN), "b2b": bias(ks[9], N_TIME, N_HIDDEN),
        # output layer
        "wo": lin(ks[10], N_HIDDEN, N_OUT),
        "bo": bias(jax.random.fold_in(key, 99), N_HIDDEN, N_OUT),
    }


def _pack_params(params):
    """Zero-pad / fuse weights into the lane-dense bf16 layout the kernel expects."""
    def pad_to(a, shape):
        return jnp.pad(a, [(0, s - d) for d, s in zip(a.shape, shape)])

    # sinusoidal-embedding constants: row 0 = [freq | freq], row 1 = [0 | pi/2]
    freq = params["freq"][0]                                                   # (HALF,)
    emb = jnp.stack([
        jnp.concatenate([freq, freq]),
        jnp.concatenate([jnp.zeros((HALF,), jnp.float32),
                         jnp.full((HALF,), math.pi / 2.0, jnp.float32)]),
    ])                                                                         # (2, 128) f32

    # layer-1 input weight: pad hidden 64->128, add a zero row for the folded-in t column
    w1 = pad_to(params["w1"], (N_IN, HP))
    w1 = jnp.concatenate([w1, jnp.zeros((1, HP), jnp.float32)], axis=0)        # (4, HP)
    w1 = w1.astype(jnp.bfloat16)

    # fused FiLM projections for both layers: [gamma1 | beta1 | gamma2 | beta2]
    fw = jnp.concatenate([pad_to(params["g1w"], (N_TIME, HP)),
                          pad_to(params["b1w"], (N_TIME, HP)),
                          pad_to(params["g2w"], (N_TIME, HP)),
                          pad_to(params["b2w"], (N_TIME, HP))],
                         axis=1).astype(jnp.bfloat16)                          # (128, 4*HP)
    fb = jnp.concatenate([pad_to(params["g1b"], (1, HP)),
                          pad_to(params["b1b"], (1, HP)),
                          pad_to(params["g2b"], (1, HP)),
                          pad_to(params["b2b"], (1, HP))], axis=1)             # (1, 4*HP) f32

    w2 = pad_to(params["w2"], (HP, HP)).astype(jnp.bfloat16)                   # (HP, HP)
    wo = pad_to(params["wo"], (HP, OUT_PAD)).astype(jnp.bfloat16)              # (HP, 128)
    bo = pad_to(params["bo"], (1, OUT_PAD))                                    # (1, 128) f32
    return (emb, w1, fw, fb, w2, wo, bo)


def dense_network(x, t, params, *, tb=2048):
    """Pallas forward. x: (B, 3) f32, t: (B,) f32 -> (B, 3) f32."""
    B = x.shape[0]
    # never tile bigger than the (8-rounded) batch
    tb = min(tb, _round_up(max(B, 1), 8))
    # keep >=2 grid steps when there is enough work so v7x's two TensorCores both get a slice
    if B >= 16:
        tb = min(tb, _round_up(pl.cdiv(B, 2), 8))
    B_pad = _round_up(B, tb)

    xt = jnp.concatenate(
        [x.astype(jnp.float32), t.reshape(B, 1).astype(jnp.float32)], axis=1)  # (B, 4)
    if B_pad != B:
        xt = jnp.pad(xt, ((0, B_pad - B), (0, 0)))

    packed = _pack_params(params)
    args = (xt,) + packed

    def full_spec(a):   # weights: one full block, resident for every grid step
        return pl.BlockSpec(a.shape, lambda i, nd=a.ndim: (0,) * nd)

    in_specs = [pl.BlockSpec((tb, XT_COLS), lambda i: (i, 0))]
    in_specs += [full_spec(a) for a in packed]

    out = pl.pallas_call(
        dense_net_kernel,
        out_shape=jax.ShapeDtypeStruct((B_pad, N_OUT), jnp.float32),
        grid=(B_pad // tb,),
        in_specs=in_specs,
        out_specs=pl.BlockSpec((tb, N_OUT), lambda i: (i, 0)),
        compiler_params=pltpu.CompilerParams(dimension_semantics=("parallel",)),
    )(*args)
    return out[:B]


def dense_network_ref(x, t, params):
    """Pure-JAX f32 reference for correctness checking (unpadded weights)."""
    ang = t.reshape(-1, 1) * params["freq"]
    temb = jnp.concatenate([jnp.sin(ang), jnp.cos(ang)], axis=-1)
    h = x
    for wl, gw, gb, bw, bb in (
        (params["w1"], params["g1w"], params["g1b"], params["b1w"], params["b1b"]),
        (params["w2"], params["g2w"], params["g2b"], params["b2w"], params["b2b"]),
    ):
        h = h @ wl
        gamma = temb @ gw + gb
        beta = temb @ bw + bb
        h = jnp.maximum(gamma * h + beta, 0.0)
    return h @ params["wo"] + params["bo"]


if __name__ == "__main__":
    key = jax.random.PRNGKey(0)
    kx, kt, kp = jax.random.split(key, 3)
    params = init_params(kp)

    # small, aligned batch (single grid step)
    B = 8
    x = jax.random.normal(kx, (B, N_IN), jnp.float32)           # 3D point coordinates
    t = jax.random.uniform(kt, (B,), jnp.float32, 0.0, 1000.0)  # diffusion timesteps
    out = jax.block_until_ready(dense_network(x, t, params))
    ref = dense_network_ref(x, t, params)
    assert out.shape == (B, N_OUT)
    # bf16 MXU operands => loosened tolerance vs the f32 reference
    assert jnp.allclose(out, ref, atol=2e-2, rtol=2e-2), "Pallas output mismatch vs reference"

    # non-multiple batch exercises the remainder/padding path and the >=2-step grid clamp
    B2 = 37
    x2 = jax.random.normal(jax.random.fold_in(kx, 1), (B2, N_IN), jnp.float32)
    t2 = jax.random.uniform(jax.random.fold_in(kt, 1), (B2,), jnp.float32, 0.0, 1000.0)
    out2 = jax.block_until_ready(dense_network(x2, t2, params))
    ref2 = dense_network_ref(x2, t2, params)
    assert out2.shape == (B2, N_OUT)
    assert jnp.allclose(out2, ref2, atol=2e-2, rtol=2e-2), "Pallas output mismatch (remainder path)"

    print("KERNEL_OK")
</pallas_src>

<mosaic_0001>
module attributes {stable_mosaic.version = 11 : i64} {
  func.func @dense_net_kernel(%arg0: i32, %arg1: memref<8x4xf32, #tpu.memory_space<vmem>>, %arg2: memref<2x128xf32, #tpu.memory_space<vmem>>, %arg3: memref<4x128xbf16, #tpu.memory_space<vmem>>, %arg4: memref<128x512xbf16, #tpu.memory_space<vmem>>, %arg5: memref<1x512xf32, #tpu.memory_space<vmem>>, %arg6: memref<128x128xbf16, #tpu.memory_space<vmem>>, %arg7: memref<128x128xbf16, #tpu.memory_space<vmem>>, %arg8: memref<1x128xf32, #tpu.memory_space<vmem>>, %arg9: memref<8x3xf32, #tpu.memory_space<vmem>>) attributes {dimension_semantics = [#tpu.dimension_semantics<parallel>], iteration_bounds = array<i64: 1>, scalar_prefetch = 0 : i64, scratch_operands = 0 : i64, tpu.core_type = #tpu.core_type<tc>, window_params = [{transform_indices = @transform_0, window_bounds = array<i64: 8, 4>}, {pipeline_mode = #tpu.pipeline_mode<synchronous>, transform_indices = @transform_1, window_bounds = array<i64: 2, 128>}, {pipeline_mode = #tpu.pipeline_mode<synchronous>, transform_indices = @transform_2, window_bounds = array<i64: 4, 128>}, {pipeline_mode = #tpu.pipeline_mode<synchronous>, transform_indices = @transform_3, window_bounds = array<i64: 128, 512>}, {pipeline_mode = #tpu.pipeline_mode<synchronous>, transform_indices = @transform_4, window_bounds = array<i64: 1, 512>}, {pipeline_mode = #tpu.pipeline_mode<synchronous>, transform_indices = @transform_5, window_bounds = array<i64: 128, 128>}, {pipeline_mode = #tpu.pipeline_mode<synchronous>, transform_indices = @transform_6, window_bounds = array<i64: 128, 128>}, {pipeline_mode = #tpu.pipeline_mode<synchronous>, transform_indices = @transform_7, window_bounds = array<i64: 1, 128>}, {transform_indices = @transform_8, window_bounds = array<i64: 8, 3>}]} {
    %c0 = arith.constant 0 : index
    %c0_0 = arith.constant 0 : index
    %0 = vector.load %arg1[%c0, %c0_0] : memref<8x4xf32, #tpu.memory_space<vmem>>, vector<8x4xf32>
    %1 = vector.extract_strided_slice %0 {offsets = [0, 3], sizes = [8, 1], strides = [1, 1]} : vector<8x4xf32> to vector<8x1xf32>
    %c0_1 = arith.constant 0 : index
    %c0_2 = arith.constant 0 : index
    %2 = vector.load %arg2[%c0_1, %c0_2] : memref<2x128xf32, #tpu.memory_space<vmem>>, vector<1x128xf32>
    %3 = vector.broadcast %1 : vector<8x1xf32> to vector<8x128xf32>
    %4 = vector.broadcast %2 : vector<1x128xf32> to vector<8x128xf32>
    %5 = arith.mulf %3, %4 : vector<8x128xf32>
    %c1 = arith.constant 1 : index
    %c0_3 = arith.constant 0 : index
    %6 = vector.load %arg2[%c1, %c0_3] : memref<2x128xf32, #tpu.memory_space<vmem>>, vector<1x128xf32>
    %7 = vector.broadcast %6 : vector<1x128xf32> to vector<8x128xf32>
    %8 = arith.addf %5, %7 : vector<8x128xf32>
    %9 = math.sin %8 : vector<8x128xf32>
    %10 = arith.truncf %9 : vector<8x128xf32> to vector<8x128xbf16>
    %c0_4 = arith.constant 0 : index
    %c0_5 = arith.constant 0 : index
    %11 = vector.load %arg4[%c0_4, %c0_5] : memref<128x512xbf16, #tpu.memory_space<vmem>>, vector<128x512xbf16>
    %cst = arith.constant dense<0.000000e+00> : vector<8x512xf32>
    %12 = tpu.matmul %10, %11, %cst {dimension_numbers = #tpu.dot_dimension_numbers<[1], [0], [0], [1], [0, 0, 1, 1], [], []>} : vector<8x128xbf16>, vector<128x512xbf16>, vector<8x512xf32> -> vector<8x512xf32>
    %c0_6 = arith.constant 0 : index
    %c0_7 = arith.constant 0 : index
    %13 = vector.load %arg5[%c0_6, %c0_7] : memref<1x512xf32, #tpu.memory_space<vmem>>, vector<1x512xf32>
    %14 = vector.broadcast %13 : vector<1x512xf32> to vector<8x512xf32>
    %15 = arith.addf %12, %14 : vector<8x512xf32>
    %16 = arith.truncf %0 : vector<8x4xf32> to vector<8x4xbf16>
    %c0_8 = arith.constant 0 : index
    %c0_9 = arith.constant 0 : index
    %17 = vector.load %arg3[%c0_8, %c0_9] : memref<4x128xbf16, #tpu.memory_space<vmem>>, vector<4x128xbf16>
    %cst_10 = arith.constant dense<0.000000e+00> : vector<8x128xf32>
    %18 = tpu.matmul %16, %17, %cst_10 {dimension_numbers = #tpu.dot_dimension_numbers<[1], [0], [0], [1], [0, 0, 1, 1], [], []>} : vector<8x4xbf16>, vector<4x128xbf16>, vector<8x128xf32> -> vector<8x128xf32>
    %19 = vector.extract_strided_slice %15 {offsets = [0, 0], sizes = [8, 128], strides = [1, 1]} : vector<8x512xf32> to vector<8x128xf32>
    %20 = arith.mulf %19, %18 : vector<8x128xf32>
    %21 = vector.extract_strided_slice %15 {offsets = [0, 128], sizes = [8, 128], strides = [1, 1]} : vector<8x512xf32> to vector<8x128xf32>
    %22 = arith.addf %20, %21 : vector<8x128xf32>
    %cst_11 = arith.constant 0.000000e+00 : f32
    %23 = vector.broadcast %cst_11 : f32 to vector<8x128xf32>
    %24 = arith.maximumf %22, %23 : vector<8x128xf32>
    %25 = arith.truncf %24 : vector<8x128xf32> to vector<8x128xbf16>
    %c0_12 = arith.constant 0 : index
    %c0_13 = arith.constant 0 : index
    %26 = vector.load %arg6[%c0_12, %c0_13] : memref<128x128xbf16, #tpu.memory_space<vmem>>, vector<128x128xbf16>
    %cst_14 = arith.constant dense<0.000000e+00> : vector<8x128xf32>
    %27 = tpu.matmul %25, %26, %cst_14 {dimension_numbers = #tpu.dot_dimension_numbers<[1], [0], [0], [1], [0, 0, 1, 1], [], []>} : vector<8x128xbf16>, vector<128x128xbf16>, vector<8x128xf32> -> vector<8x128xf32>
    %28 = vector.extract_strided_slice %15 {offsets = [0, 256], sizes = [8, 128], strides = [1, 1]} : vector<8x512xf32> to vector<8x128xf32>
    %29 = arith.mulf %28, %27 : vector<8x128xf32>
    %30 = vector.extract_strided_slice %15 {offsets = [0, 384], sizes = [8, 128], strides = [1, 1]} : vector<8x512xf32> to vector<8x128xf32>
    %31 = arith.addf %29, %30 : vector<8x128xf32>
    %cst_15 = arith.constant 0.000000e+00 : f32
    %32 = vector.broadcast %cst_15 : f32 to vector<8x128xf32>
    %33 = arith.maximumf %31, %32 : vector<8x128xf32>
    %34 = arith.truncf %33 : vector<8x128xf32> to vector<8x128xbf16>
    %c0_16 = arith.constant 0 : index
    %c0_17 = arith.constant 0 : index
    %35 = vector.load %arg7[%c0_16, %c0_17] : memref<128x128xbf16, #tpu.memory_space<vmem>>, vector<128x128xbf16>
    %cst_18 = arith.constant dense<0.000000e+00> : vector<8x128xf32>
    %36 = tpu.matmul %34, %35, %cst_18 {dimension_numbers = #tpu.dot_dimension_numbers<[1], [0], [0], [1], [0, 0, 1, 1], [], []>} : vector<8x128xbf16>, vector<128x128xbf16>, vector<8x128xf32> -> vector<8x128xf32>
    %c0_19 = arith.constant 0 : index
    %c0_20 = arith.constant 0 : index
    %37 = vector.load %arg8[%c0_19, %c0_20] : memref<1x128xf32, #tpu.memory_space<vmem>>, vector<1x128xf32>
    %38 = vector.broadcast %37 : vector<1x128xf32> to vector<8x128xf32>
    %39 = arith.addf %36, %38 : vector<8x128xf32>
    %40 = vector.extract_strided_slice %39 {offsets = [0, 0], sizes = [8, 3], strides = [1, 1]} : vector<8x128xf32> to vector<8x3xf32>
    %c0_21 = arith.constant 0 : index
    %c0_22 = arith.constant 0 : index
    %41 = vector.load %arg9[%c0_21, %c0_22] : memref<8x3xf32, #tpu.memory_space<vmem>>, vector<8x3xf32>
    tpu.vector_store %arg9[%c0_21, %c0_22], %40 {strides = array<i32>} : memref<8x3xf32, #tpu.memory_space<vmem>>, vector<8x3xf32>,
    return
  }
  func.func @transform_0(%arg0: i32) -> (i32, i32) {
    %c0_i32 = arith.constant 0 : i32
    %c0_i32_0 = arith.constant 0 : i32
    return %arg0, %c0_i32 : i32, i32
  }
  func.func @transform_1(%arg0: i32) -> (i32, i32) {
    %c0_i32 = arith.constant 0 : i32
    %c0_i32_0 = arith.constant 0 : i32
    %c0_i32_1 = arith.constant 0 : i32
    return %c0_i32, %c0_i32_0 : i32, i32
  }
  func.func @transform_2(%arg0: i32) -> (i32, i32) {
    %c0_i32 = arith.constant 0 : i32
    %c0_i32_0 = arith.constant 0 : i32
    %c0_i32_1 = arith.constant 0 : i32
    return %c0_i32, %c0_i32_0 : i32, i32
  }
  func.func @transform_3(%arg0: i32) -> (i32, i32) {
    %c0_i32 = arith.constant 0 : i32
    %c0_i32_0 = arith.constant 0 : i32
    %c0_i32_1 = arith.constant 0 : i32
    return %c0_i32, %c0_i32_0 : i32, i32
  }
  func.func @transform_4(%arg0: i32) -> (i32, i32) {
    %c0_i32 = arith.constant 0 : i32
    %c0_i32_0 = arith.constant 0 : i32
    %c0_i32_1 = arith.constant 0 : i32
    return %c0_i32, %c0_i32_0 : i32, i32
  }
  func.func @transform_5(%arg0: i32) -> (i32, i32) {
    %c0_i32 = arith.constant 0 : i32
    %c0_i32_0 = arith.constant 0 : i32
    %c0_i32_1 = arith.constant 0 : i32
    return %c0_i32, %c0_i32_0 : i32, i32
  }
  func.func @transform_6(%arg0: i32) -> (i32, i32) {
    %c0_i32 = arith.constant 0 : i32
    %c0_i32_0 = arith.constant 0 : i32
    %c0_i32_1 = arith.constant 0 : i32
    return %c0_i32, %c0_i32_0 : i32, i32
  }
  func.func @transform_7(%arg0: i32) -> (i32, i32) {
    %c0_i32 = arith.constant 0 : i32
    %c0_i32_0 = arith.constant 0 : i32
    %c0_i32_1 = arith.constant 0 : i32
    return %c0_i32, %c0_i32_0 : i32, i32
  }
  func.func @transform_8(%arg0: i32) -> (i32, i32) {
    %c0_i32 = arith.constant 0 : i32
    %c0_i32_0 = arith.constant 0 : i32
    return %arg0, %c0_i32 : i32, i32
  }
}

</mosaic_0001>

<llo_original>
// kernel: tpu_custom_call.1
$region0: #{tpu_custom_call.1}
  #allocation0 [shape = 'u32[]', space=smem, size = 0x4, offset = 0x4, fixed_abs, tag = 'smem constant byte address 0x4 - core index']
  #allocation1 [shape = 'u32[72,128]{1,0:T(1,128)}', space=vmem, size = 0x9000, scoped, tag = 'internal scratch']
  %s0 = inlined_call_operand.vmem [shape: f32[8,4], index: 0, kind: input, shape index: {}]
  %s1 = inlined_call_operand.vmem [shape: f32[2,128], index: 1, kind: input, shape index: {}]
  %s2 = inlined_call_operand.vmem [shape: bf16[4,128], index: 2, kind: input, shape index: {}]
  %s3 = inlined_call_operand.hbm [shape: bf16[128,512], index: 3, kind: input, shape index: {}]
  %s4 = inlined_call_operand.vmem [shape: f32[1,512], index: 4, kind: input, shape index: {}]
  %s5 = inlined_call_operand.hbm [shape: bf16[128,128], index: 5, kind: input, shape index: {}]
  %s6 = inlined_call_operand.hbm [shape: bf16[128,128], index: 6, kind: input, shape index: {}]
  %s7 = inlined_call_operand.vmem [shape: f32[1,128], index: 7, kind: input, shape index: {}]
  %s8 = inlined_call_operand.vmem [shape: f32[8,3], index: 8, kind: output, shape index: {}]
  %s9 = sld [smem:[#allocation0]]
  $region54: #{tpu_custom_call.1} parent=0
    _
  %s11 = ssub.s32 1, %s9
  %s12 = scalar_select 0, %s11, %s9
  $region1: #{tpu_custom_call.1} parent=0
    #allocation2 [shape = 'u8[131072]{0}', space=vmem, size = 0x20000, scoped, tag = 'input window, operand 3, single buffered']
    #allocation3 [shape = 's32[1]{0}', space=sflag, size = 0x4, scoped, tag = 'scoped memory for tpu_custom_call.1']
    #allocation4 [shape = 'u8[32768]{0}', space=vmem, size = 0x8000, scoped, tag = 'input window, operand 5, single buffered']
    #allocation5 [shape = 's32[1]{0}', space=sflag, size = 0x4, scoped, tag = 'scoped memory for tpu_custom_call.1']
    #allocation6 [shape = 'u8[32768]{0}', space=vmem, size = 0x8000, scoped, tag = 'input window, operand 6, single buffered']
    %13 = vsyncpa [#allocation3], 0
    %14 = vsyncpa [#allocation5], 0
    // Predicated region
    $region2: #{tpu_custom_call.1} parent=1 // pred_check
      _
    $region3: #{tpu_custom_call.1} parent=1 // pred_check_branch
      %16 = sbr.rel (0) target = $region5
    $region4: #{tpu_custom_call.1} parent=1 // pred_region
      _
    $region5: #{tpu_custom_call.1} parent=1 // pred_fallthru
      _
    // Predicated region
    $region6: #{tpu_custom_call.1} parent=1 // pred_check
      _
    $region7: #{tpu_custom_call.1} parent=1 // pred_check_branch
      %18 = sbr.rel (0) target = $region9
    $region8: #{tpu_custom_call.1} parent=1 // pred_region
      _
    $region9: #{tpu_custom_call.1} parent=1 // pred_fallthru
      _
    // Predicated region
    $region10: #{tpu_custom_call.1} parent=1 // pred_check
      _
    $region11: #{tpu_custom_call.1} parent=1 // pred_check_branch
      %20 = sbr.rel (0) target = $region13
    $region12: #{tpu_custom_call.1} parent=1 // pred_region
      _
    $region13: #{tpu_custom_call.1} parent=1 // pred_fallthru
      _
    // Predicated region
    $region14: #{tpu_custom_call.1} parent=1 // pred_check
      _
    $region15: #{tpu_custom_call.1} parent=1 // pred_check_branch
      %22 = sbr.rel (0) target = $region17
    $region16: #{tpu_custom_call.1} parent=1 // pred_region
      %24 = vsyncadd [#allocation3], 0
      %s25 = sshll.u32 %s3, 4
      %s26 = int_to_ptr.hbm [resolvable:$true] %s25
      %s27 = sshll.u32 [#allocation2], 4
      %s28 = int_to_ptr.vmem [resolvable:$true] %s27
      %33 = dma.hbm_to_vmem [thread:$0]  %s26, 4096, %s28, [#allocation3], 256, 256, 16
    $region17: #{tpu_custom_call.1} parent=1 // pred_fallthru
      _
    // Predicated region
    $region18: #{tpu_custom_call.1} parent=1 // pred_check
      _
    $region19: #{tpu_custom_call.1} parent=1 // pred_check_branch
      %35 = sbr.rel (0) target = $region21
    $region20: #{tpu_custom_call.1} parent=1 // pred_region
      _
    $region21: #{tpu_custom_call.1} parent=1 // pred_fallthru
      _
    // Predicated region
    $region22: #{tpu_custom_call.1} parent=1 // pred_check
      _
    $region23: #{tpu_custom_call.1} parent=1 // pred_check_branch
      %37 = sbr.rel (0) target = $region25
    $region24: #{tpu_custom_call.1} parent=1 // pred_region
      %39 = vsyncadd [#allocation5], 0
      %s40 = sshll.u32 %s5, 4
      %s41 = int_to_ptr.hbm [resolvable:$true] %s40
      %s42 = sshll.u32 [#allocation4], 4
      %s43 = int_to_ptr.vmem [resolvable:$true] %s42
      %48 = dma.hbm_to_vmem [thread:$0]  %s41, 1024, %s43, [#allocation5], 64, 64, 4
    $region25: #{tpu_custom_call.1} parent=1 // pred_fallthru
      _
    // Predicated region
    $region26: #{tpu_custom_call.1} parent=1 // pred_check
      _
    $region27: #{tpu_custom_call.1} parent=1 // pred_check_branch
      %50 = sbr.rel (0) target = $region29
    $region28: #{tpu_custom_call.1} parent=1 // pred_region
      %52 = vsyncadd [#allocation5], 0
      %s53 = sshll.u32 %s6, 4
      %s54 = int_to_ptr.hbm [resolvable:$true] %s53
      %s55 = sshll.u32 [#allocation6], 4
      %s56 = int_to_ptr.vmem [resolvable:$true] %s55
      %61 = dma.hbm_to_vmem [thread:$0]  %s54, 1024, %s56, [#allocation5], 64, 64, 4
    $region29: #{tpu_custom_call.1} parent=1 // pred_fallthru
      _
    // Predicated region
    $region30: #{tpu_custom_call.1} parent=1 // pred_check
      _
    $region31: #{tpu_custom_call.1} parent=1 // pred_check_branch
      %63 = sbr.rel (0) target = $region33
    $region32: #{tpu_custom_call.1} parent=1 // pred_region
      _
    $region33: #{tpu_custom_call.1} parent=1 // pred_fallthru
      _
    // Predicated region
    $region34: #{tpu_custom_call.1} parent=1 // pred_check
      _
    $region35: #{tpu_custom_call.1} parent=1 // pred_check_branch
      %65 = sbr.rel (0) target = $region37
    $region36: #{tpu_custom_call.1} parent=1 // pred_region
      %67 = dma.done [#allocation3], 4096
    $region37: #{tpu_custom_call.1} parent=1 // pred_fallthru
      _
    // Predicated region
    $region38: #{tpu_custom_call.1} parent=1 // pred_check
      _
    $region39: #{tpu_custom_call.1} parent=1 // pred_check_branch
      %69 = sbr.rel (0) target = $region41
    $region40: #{tpu_custom_call.1} parent=1 // pred_region
      %71 = dma.done [#allocation5], 1024
    $region41: #{tpu_custom_call.1} parent=1 // pred_fallthru
      _
    // Predicated region
    $region42: #{tpu_custom_call.1} parent=1 // pred_check
      _
    $region43: #{tpu_custom_call.1} parent=1 // pred_check_branch
      %73 = sbr.rel (0) target = $region45
    $region44: #{tpu_custom_call.1} parent=1 // pred_region
      %75 = dma.done [#allocation5], 1024
    $region45: #{tpu_custom_call.1} parent=1 // pred_fallthru
      _
    %v77 = vld [vmem:[%s0] sm:$0xff]
    %v78 = vld [vmem:[%s1] sm:$0x1]
    %80 = vset.pattern.permute.xlu0 3
    %81 = vperm.xlu0 %80, %v77
    %v82 = vpop.permute.xlu0 %81
    %v84 = vperm.slane %v78, 0
    %v85 = vmul.f32 %v82, %v84
    %v86 = vld [vmem:[%s1 + $0x1] sm:$0x1]
    %v87 = vperm.slane %v86, 0
    %v88 = vadd.f32 %v85, %v87
    %v89 = vand.u32 2147483647, %v88
    %vm90 = vcmp.le.f32.partialorder %v89, 0.7853982
    %vm91 = vcmp.lt.s32.totalorder %v88, 0
    %v92 = vand.u32 %v88, 2139095040
    %v93 = vshrl.u32 %v92, 23
    %v94 = vsub.s32 %v93, 127
    %v95 = vand.u32 2147483647, %v88
    %v96 = vand.u32 %v95, 8388607
    %v97 = vor.u32 %v96, 8388608
    %v98 = vsub.s32 0, %v97
    %v99 = vadd.s32 %v94, 1
    %vm100 = vcmp.gt.s32.totalorder %v99, 0
    %v101 = vsel %vm100, %v99, 0
    %v102 = vshrl.u32 %v101, 5
    %v103 = vand.u32 %v101, 31
    %v104 = vsub.s32 32, %v103
    %v105 = vshrl.u32 683565275, %v104
    %v106 = vshll.u32 683565275, %v103
    %v107 = vshrl.u32 2475754826, %v104
    %v108 = vor.u32 %v106, %v107
    %v109 = vshll.u32 2475754826, %v103
    %v110 = vshrl.u32 2131351028, %v104
    %v111 = vor.u32 %v109, %v110
    %v112 = vshll.u32 2131351028, %v103
    %v113 = vshrl.u32 2102212464, %v104
    %v114 = vor.u32 %v112, %v113
    %v115 = vshll.u32 2102212464, %v103
    %v116 = vshrl.u32 920167782, %v104
    %v117 = vor.u32 %v115, %v116
    %v118 = vshll.u32 920167782, %v103
    %v119 = vshrl.u32 1326507024, %v104
    %v120 = vor.u32 %v118, %v119
    %vm121 = vcmp.lt.s32.totalorder %v102, 1
    %vm122 = vcmp.lt.s32.totalorder %v102, 2
    %vm123 = vcmp.lt.s32.totalorder %v102, 3
    %vm124 = vcmp.lt.s32.totalorder %v102, 4
    %v125 = vsel %vm121, %v105, %v108
    %v126 = vsel %vm124, %v114, 2102212464
    %v127 = vsel %vm123, %v111, %v126
    %v128 = vsel %vm122, %v125, %v127
    %v129 = vsel %vm121, %v108, %v111
    %v130 = vsel %vm124, %v117, 920167782
    %v131 = vsel %vm123, %v114, %v130
    %v132 = vsel %vm122, %v129, %v131
    %v133 = vsel %vm121, %v111, %v114
    %v134 = vsel %vm124, %v120, 1326507024
    %v135 = vsel %vm123, %v117, %v134
    %v136 = vsel %vm122, %v133, %v135
    %v137 = vshll.u32 %v97, 8
    %v138 = vand.u32 %v137, 65535
    %v139 = vshrl.u32 %v137, 16
    %v140 = vand.u32 %v136, 65535
    %v141 = vshrl.u32 %v136, 16
    %v142 = vmul.u32 %v138, %v140
    %v143 = vmul.u32 %v138, %v141
    %v144 = vmul.u32 %v139, %v140
    %v145 = vmul.u32 %v139, %v141
    %v146 = vshll.u32 %v143, 16
    %v147 = vshrl.u32 %v143, 16
    %v148 = vshll.u32 %v144, 16
    %v149 = vshrl.u32 %v144, 16
    %vm150 = vc.u32 %v142, %v146
    %v151 = vsel %vm150, 1, 0
    %v152 = vadd.s32 %v142, %v146
    %v153 = vadd.s32 %v145, %v151
    %vm154 = vc.u32 %v152, %v148
    %v155 = vsel %vm154, 1, 0
    %v156 = vadd.s32 %v152, %v148
    %v157 = vadd.s32 %v153, %v155
    %v158 = vadd.s32 %v157, %v147
    %v159 = vadd.s32 %v158, %v149
    %v160 = vand.u32 %v137, 65535
    %v161 = vshrl.u32 %v137, 16
    %v162 = vand.u32 %v132, 65535
    %v163 = vshrl.u32 %v132, 16
    %v164 = vmul.u32 %v160, %v162
    %v165 = vmul.u32 %v160, %v163
    %v166 = vmul.u32 %v161, %v162
    %v167 = vmul.u32 %v161, %v163
    %v168 = vshll.u32 %v165, 16
    %v169 = vshrl.u32 %v165, 16
    %v170 = vshll.u32 %v166, 16
    %v171 = vshrl.u32 %v166, 16
    %vm172 = vc.u32 %v164, %v168
    %v173 = vsel %vm172, 1, 0
    %v174 = vadd.s32 %v164, %v168
    %v175 = vadd.s32 %v167, %v173
    %vm176 = vc.u32 %v174, %v170
    %v177 = vsel %vm176, 1, 0
    %v178 = vadd.s32 %v174, %v170
    %v179 = vadd.s32 %v175, %v177
    %v180 = vadd.s32 %v179, %v169
    %v181 = vadd.s32 %v180, %v171
    %v182 = vmul.u32 %v137, %v128
    %v183 = vadd.s32 %v159, %v178
    %vm184 = vc.u32 %v159, %v178
    %v185 = vadd.s32 %v181, 1
    %v186 = vsel %vm184, %v185, %v181
    %v187 = vadd.s32 %v182, %v186
    %v188 = vadd.s32 %v187, 536870912
    %v189 = vshrl.u32 %v188, 30
    %v190 = vshll.u32 %v189, 30
    %v191 = vsub.s32 %v187, %v190
    %vm192 = vcmp.lt.s32.totalorder %v191, 0
    %v193 = vsub.s32 0, %v191
    %v194 = vsel %vm192, %v193, %v191
    %v195 = vclz %v194
    %v196 = vsub.s32 %v195, 2
    %vm197 = vcmp.gt.s32.totalorder 0, %v196
    %v198 = vsel %vm197, 0, %v196
    %v199 = vsub.s32 32, %v198
    %v200 = vshll.u32 %v191, %v198
    %v201 = vshrl.u32 %v183, %v199
    %v202 = vor.u32 %v200, %v201
    %v203 = vsub.s32 4294967266, %v198
    %v204 = vadd.s32 %v203, 127
    %v205 = vshll.u32 %v204, 23
    %v206 = vor.u32 4788187, %v205
    %v207 = vand.u32 2147483647, %v206
    %v209 = vcvt.s32.f32 %v202
    %v210 = vmul.f32 %v209, %v207
    %v211 = vxor.u32 %v210, 2147483648
    %v212 = vsel %vm91, %v211, %v210
    %v213 = vsub.s32 4, %v189
    %v214 = vsel %vm91, %v213, %v189
    %v215 = vsel %vm90, %v88, %v212
    %v216 = vsel %vm90, 0, %v214
    %v217 = vmul.f32 %v215, %v215
    %v218 = vmul.f32 %v217, -0.001358992
    %v219 = vadd.f32 %v218, 0.041655596
    %v220 = vmul.f32 %v217, %v219
    %v221 = vadd.f32 %v220, -0.4999988
    %v222 = vmul.f32 %v217, %v221
    %v223 = vadd.f32 1.0, %v222
    %v224 = vmul.f32 %v215, %v215
    %v225 = vmul.f32 %v224, -0.00019511016
    %v226 = vadd.f32 %v225, 0.008332121
    %v227 = vmul.f32 %v224, %v226
    %v228 = vadd.f32 %v227, -0.16666654
    %v229 = vmul.f32 %v224, %v228
    %v230 = vadd.f32 %v229, 1.0
    %v231 = vmul.f32 %v230, %v215
    %vm232 = vweird.f32 %v88
    %v233 = vadd.s32 %v216, 3
    %v234 = vand.u32 %v233, 3
    %vm235 = vcmp.lt.s32.totalorder %v234, 2
    %vm236 = vcmp.eq.s32.totalorder %v234, 0
    %v237 = vxor.u32 %v231, 2147483648
    %v238 = vsel %vm236, %v223, %v237
    %vm239 = vcmp.eq.s32.totalorder %v234, 2
    %v240 = vxor.u32 %v223, 2147483648
    %v241 = vsel %vm239, %v240, %v231
    %v242 = vsel %vm235, %v238, %v241
    %v243 = vsel %vm232, nan, %v242
    %v244 = vpack.c.bf16 %v243, %v243
    %v245 = vld [vmem:[#allocation2] sm:$0xff]
    %v246 = vld [vmem:[#allocation2 + $0x8] sm:$0xff]
    %v247 = vld [vmem:[#allocation2 + $0x10] sm:$0xff]
    %v248 = vld [vmem:[#allocation2 + $0x18] sm:$0xff]
    %v249 = vld [vmem:[#allocation2 + $0x20] sm:$0xff]
    %v250 = vld [vmem:[#allocation2 + $0x28] sm:$0xff]
    %v251 = vld [vmem:[#allocation2 + $0x30] sm:$0xff]
    %v252 = vld [vmem:[#allocation2 + $0x38] sm:$0xff]
    %v253 = vld [vmem:[#allocation2 + $0x40] sm:$0xff]
    %v254 = vld [vmem:[#allocation2 + $0x48] sm:$0xff]
    %v255 = vld [vmem:[#allocation2 + $0x50] sm:$0xff]
    %v256 = vld [vmem:[#allocation2 + $0x58] sm:$0xff]
    %v257 = vld [vmem:[#allocation2 + $0x60] sm:$0xff]
    %v258 = vld [vmem:[#allocation2 + $0x68] sm:$0xff]
    %v259 = vld [vmem:[#allocation2 + $0x70] sm:$0xff]
    %v260 = vld [vmem:[#allocation2 + $0x78] sm:$0xff]
    %v261 = vld [vmem:[#allocation2 + $0x80] sm:$0xff]
    %v262 = vld [vmem:[#allocation2 + $0x88] sm:$0xff]
    %v263 = vld [vmem:[#allocation2 + $0x90] sm:$0xff]
    %v264 = vld [vmem:[#allocation2 + $0x98] sm:$0xff]
    %v265 = vld [vmem:[#allocation2 + $0xa0] sm:$0xff]
    %v266 = vld [vmem:[#allocation2 + $0xa8] sm:$0xff]
    %v267 = vld [vmem:[#allocation2 + $0xb0] sm:$0xff]
    %v268 = vld [vmem:[#allocation2 + $0xb8] sm:$0xff]
    %v269 = vld [vmem:[#allocation2 + $0xc0] sm:$0xff]
    %v270 = vld [vmem:[#allocation2 + $0xc8] sm:$0xff]
    %v271 = vld [vmem:[#allocation2 + $0xd0] sm:$0xff]
    %v272 = vld [vmem:[#allocation2 + $0xd8] sm:$0xff]
    %v273 = vld [vmem:[#allocation2 + $0xe0] sm:$0xff]
    %v274 = vld [vmem:[#allocation2 + $0xe8] sm:$0xff]
    %v275 = vld [vmem:[#allocation2 + $0xf0] sm:$0xff]
    %v276 = vld [vmem:[#allocation2 + $0xf8] sm:$0xff]
    %v277 = vld [vmem:[%s4] sm:$0xf]
    %v279 = vperm.slane %v277, 0
    %v280 = vperm.slane %v277, 1
    %v281 = vperm.slane %v277, 2
    %v282 = vperm.slane %v277, 3
    %v319 = vunpack.c.l.b16 %v245
    %v320 = vunpack.c.h.b16 %v245
    %v321 = vunpack.c.l.b16 %v246
    %v322 = vunpack.c.h.b16 %v246
    %v323 = vunpack.c.l.b16 %v247
    %v324 = vunpack.c.h.b16 %v247
    %v325 = vunpack.c.l.b16 %v248
    %v326 = vunpack.c.h.b16 %v248
    %v327 = vunpack.c.l.b16 %v249
    %v328 = vunpack.c.h.b16 %v249
    %v329 = vunpack.c.l.b16 %v250
    %v330 = vunpack.c.h.b16 %v250
    %v331 = vunpack.c.l.b16 %v251
    %v332 = vunpack.c.h.b16 %v251
    %v333 = vunpack.c.l.b16 %v252
    %v334 = vunpack.c.h.b16 %v252
    %v335 = vunpack.c.l.b16 %v253
    %v336 = vunpack.c.h.b16 %v253
    %v337 = vunpack.c.l.b16 %v254
    %v338 = vunpack.c.h.b16 %v254
    %v339 = vunpack.c.l.b16 %v255
    %v340 = vunpack.c.h.b16 %v255
    %v341 = vunpack.c.l.b16 %v256
    %v342 = vunpack.c.h.b16 %v256
    %v343 = vunpack.c.l.b16 %v257
    %v344 = vunpack.c.h.b16 %v257
    %v345 = vunpack.c.l.b16 %v258
    %v346 = vunpack.c.h.b16 %v258
    %v347 = vunpack.c.l.b16 %v259
    %v348 = vunpack.c.h.b16 %v259
    %v349 = vunpack.c.l.b16 %v260
    %v350 = vunpack.c.h.b16 %v260
    %v351 = vunpack.c.l.b16 %v261
    %v352 = vunpack.c.h.b16 %v261
    %v353 = vunpack.c.l.b16 %v262
    %v354 = vunpack.c.h.b16 %v262
    %v355 = vunpack.c.l.b16 %v263
    %v356 = vunpack.c.h.b16 %v263
    %v357 = vunpack.c.l.b16 %v264
    %v358 = vunpack.c.h.b16 %v264
    %v359 = vunpack.c.l.b16 %v265
    %v360 = vunpack.c.h.b16 %v265
    %v361 = vunpack.c.l.b16 %v266
    %v362 = vunpack.c.h.b16 %v266
    %v363 = vunpack.c.l.b16 %v267
    %v364 = vunpack.c.h.b16 %v267
    %v365 = vunpack.c.l.b16 %v268
    %v366 = vunpack.c.h.b16 %v268
    %v367 = vunpack.c.l.b16 %v269
    %v368 = vunpack.c.h.b16 %v269
    %v369 = vunpack.c.l.b16 %v270
    %v370 = vunpack.c.h.b16 %v270
    %v371 = vunpack.c.l.b16 %v271
    %v372 = vunpack.c.h.b16 %v271
    %v373 = vunpack.c.l.b16 %v272
    %v374 = vunpack.c.h.b16 %v272
    %v375 = vunpack.c.l.b16 %v273
    %v376 = vunpack.c.h.b16 %v273
    %v377 = vunpack.c.l.b16 %v274
    %v378 = vunpack.c.h.b16 %v274
    %v379 = vunpack.c.l.b16 %v275
    %v380 = vunpack.c.h.b16 %v275
    %v381 = vunpack.c.l.b16 %v276
    %v382 = vunpack.c.h.b16 %v276
    %v383 = vpack.c.b16 %v323, %v319
    %v384 = vpack.c.b16 %v324, %v320
    %v385 = vpack.c.b16 %v325, %v321
    %v386 = vpack.c.b16 %v326, %v322
    %v387 = vpack.c.b16 %v331, %v327
    %v388 = vpack.c.b16 %v332, %v328
    %v389 = vpack.c.b16 %v333, %v329
    %v390 = vpack.c.b16 %v334, %v330
    %v391 = vpack.c.b16 %v339, %v335
    %v392 = vpack.c.b16 %v340, %v336
    %v393 = vpack.c.b16 %v341, %v337
    %v394 = vpack.c.b16 %v342, %v338
    %v395 = vpack.c.b16 %v347, %v343
    %v396 = vpack.c.b16 %v348, %v344
    %v397 = vpack.c.b16 %v349, %v345
    %v398 = vpack.c.b16 %v350, %v346
    %v399 = vpack.c.b16 %v355, %v351
    %v400 = vpack.c.b16 %v356, %v352
    %v401 = vpack.c.b16 %v357, %v353
    %v402 = vpack.c.b16 %v358, %v354
    %v403 = vpack.c.b16 %v363, %v359
    %v404 = vpack.c.b16 %v364, %v360
    %v405 = vpack.c.b16 %v365, %v361
    %v406 = vpack.c.b16 %v366, %v362
    %v407 = vpack.c.b16 %v371, %v367
    %v408 = vpack.c.b16 %v372, %v368
    %v409 = vpack.c.b16 %v373, %v369
    %v410 = vpack.c.b16 %v374, %v370
    %v411 = vpack.c.b16 %v379, %v375
    %v412 = vpack.c.b16 %v380, %v376
    %v413 = vpack.c.b16 %v381, %v377
    %v414 = vpack.c.b16 %v382, %v378
    %447 = vmatpush.bf16.msra.mxu0 %v411
    %448 = vmatpush.bf16.msra.mxu0 %v407
    %449 = vmatpush.bf16.msra.mxu0 %v403
    %450 = vmatpush.bf16.msra.mxu0 %v399
    %451 = vmatpush.bf16.msra.mxu0 %v395
    %452 = vmatpush.bf16.msra.mxu0 %v391
    %453 = vmatpush.bf16.msra.mxu0 %v387
    %454 = vmatpush.bf16.msra.mxu0 %v383
    %455 = vmatmul.bf16.gmra.mxu0 %v244
    %v456 = vpop.f32.mrf.mxu0
    %v457 = vadd.f32 %v279, %v456
    %v458 = vpop.f32.mrf.mxu0
    %459 = vdwg.mxu0
    %460 = vmatpush.bf16.msra.mxu0 %v412
    %461 = vmatpush.bf16.msra.mxu0 %v408
    %462 = vmatpush.bf16.msra.mxu0 %v404
    %463 = vmatpush.bf16.msra.mxu0 %v400
    %464 = vmatpush.bf16.msra.mxu0 %v396
    %465 = vmatpush.bf16.msra.mxu0 %v392
    %466 = vmatpush.bf16.msra.mxu0 %v388
    %467 = vmatpush.bf16.msra.mxu0 %v384
    %468 = vmatmul.bf16.gmra.mxu0 %v244
    %v469 = vpop.f32.mrf.mxu0
    %v470 = vadd.f32 %v280, %v469
    %v471 = vpop.f32.mrf.mxu0
    %472 = vdwg.mxu0
    %473 = vmatpush.bf16.msra.mxu0 %v413
    %474 = vmatpush.bf16.msra.mxu0 %v409
    %475 = vmatpush.bf16.msra.mxu0 %v405
    %476 = vmatpush.bf16.msra.mxu0 %v401
    %477 = vmatpush.bf16.msra.mxu0 %v397
    %478 = vmatpush.bf16.msra.mxu0 %v393
    %479 = vmatpush.bf16.msra.mxu0 %v389
    %480 = vmatpush.bf16.msra.mxu0 %v385
    %481 = vmatmul.bf16.gmra.mxu0 %v244
    %v482 = vpop.f32.mrf.mxu0
    %v483 = vadd.f32 %v281, %v482
    %v484 = vpop.f32.mrf.mxu0
    %485 = vdwg.mxu0
    %486 = vmatpush.bf16.msra.mxu0 %v414
    %487 = vmatpush.bf16.msra.mxu0 %v410
    %488 = vmatpush.bf16.msra.mxu0 %v406
    %489 = vmatpush.bf16.msra.mxu0 %v402
    %490 = vmatpush.bf16.msra.mxu0 %v398
    %491 = vmatpush.bf16.msra.mxu0 %v394
    %492 = vmatpush.bf16.msra.mxu0 %v390
    %493 = vmatpush.bf16.msra.mxu0 %v386
    %494 = vmatmul.bf16.gmra.mxu0 %v244
    %v495 = vpop.f32.mrf.mxu0
    %v496 = vadd.f32 %v282, %v495
    %v497 = vpop.f32.mrf.mxu0
    %498 = vdwg.mxu0
    %v499 = vpack.c.bf16 %v77, %v77
    %v500 = vld [vmem:[%s2] sm:$0x3]
    %vm501 = vcmask 31744
    %v503 = vsel %vm501, %v499, 0
    %vm505 = vcmask 1041408
    %v507 = vsel %vm505, %v500, 0
    %509 = vmatpush.bf16.msra.mxu0 0
    %510 = vmatpush.bf16.msra.mxu0 0
    %511 = vmatpush.bf16.msra.mxu0 0
    %512 = vmatpush.bf16.msra.mxu0 0
    %513 = vmatpush.bf16.msra.mxu0 0
    %514 = vmatpush.bf16.msra.mxu0 0
    %515 = vmatpush.bf16.msra.mxu0 0
    %516 = vmatpush.bf16.msra.mxu0 %v507
    %517 = vmatmul.bf16.gmra.mxu0 %v503
    %v518 = vpop.f32.mrf.mxu0
    %v519 = vadd.f32 0.0, %v518
    %v520 = vpop.f32.mrf.mxu0
    %521 = vdwg.mxu0
    %v522 = vmul.f32 %v457, %v519
    %v523 = vadd.f32 %v522, %v470
    %v524 = vmax.f32 %v523, 0.0
    %v525 = vpack.c.bf16 %v524, %v524
    %v526 = vld [vmem:[#allocation4] sm:$0xf]
    %v527 = vld [vmem:[#allocation4 + $0x4] sm:$0xf]
    %v528 = vld [vmem:[#allocation4 + $0x8] sm:$0xf]
    %v529 = vld [vmem:[#allocation4 + $0xc] sm:$0xf]
    %v530 = vld [vmem:[#allocation4 + $0x10] sm:$0xf]
    %v531 = vld [vmem:[#allocation4 + $0x14] sm:$0xf]
    %v532 = vld [vmem:[#allocation4 + $0x18] sm:$0xf]
    %v533 = vld [vmem:[#allocation4 + $0x1c] sm:$0xf]
    %v534 = vld [vmem:[#allocation4 + $0x20] sm:$0xf]
    %v535 = vld [vmem:[#allocation4 + $0x24] sm:$0xf]
    %v536 = vld [vmem:[#allocation4 + $0x28] sm:$0xf]
    %v537 = vld [vmem:[#allocation4 + $0x2c] sm:$0xf]
    %v538 = vld [vmem:[#allocation4 + $0x30] sm:$0xf]
    %v539 = vld [vmem:[#allocation4 + $0x34] sm:$0xf]
    %v540 = vld [vmem:[#allocation4 + $0x38] sm:$0xf]
    %v541 = vld [vmem:[#allocation4 + $0x3c] sm:$0xf]
    %v558 = vunpack.c.l.b16 %v526
    %v559 = vunpack.c.l.b16 %v527
    %v560 = vunpack.c.l.b16 %v528
    %v561 = vunpack.c.l.b16 %v529
    %v562 = vunpack.c.l.b16 %v530
    %v563 = vunpack.c.l.b16 %v531
    %v564 = vunpack.c.l.b16 %v532
    %v565 = vunpack.c.l.b16 %v533
    %v566 = vunpack.c.l.b16 %v534
    %v567 = vunpack.c.l.b16 %v535
    %v568 = vunpack.c.l.b16 %v536
    %v569 = vunpack.c.l.b16 %v537
    %v570 = vunpack.c.l.b16 %v538
    %v571 = vunpack.c.l.b16 %v539
    %v572 = vunpack.c.l.b16 %v540
    %v573 = vunpack.c.l.b16 %v541
    %v574 = vpack.c.b16 %v559, %v558
    %v575 = vpack.c.b16 %v561, %v560
    %v576 = vpack.c.b16 %v563, %v562
    %v577 = vpack.c.b16 %v565, %v564
    %v578 = vpack.c.b16 %v567, %v566
    %v579 = vpack.c.b16 %v569, %v568
    %v580 = vpack.c.b16 %v571, %v570
    %v581 = vpack.c.b16 %v573, %v572
    %590 = vmatpush.bf16.msra.mxu0 %v581
    %591 = vmatpush.bf16.msra.mxu0 %v580
    %592 = vmatpush.bf16.msra.mxu0 %v579
    %593 = vmatpush.bf16.msra.mxu0 %v578
    %594 = vmatpush.bf16.msra.mxu0 %v577
    %595 = vmatpush.bf16.msra.mxu0 %v576
    %596 = vmatpush.bf16.msra.mxu0 %v575
    %597 = vmatpush.bf16.msra.mxu0 %v574
    %598 = vmatmul.bf16.gmra.mxu0 %v525
    %v599 = vpop.f32.mrf.mxu0
    %v600 = vadd.f32 0.0, %v599
    %v601 = vpop.f32.mrf.mxu0
    %602 = vdwg.mxu0
    %v603 = vmul.f32 %v483, %v600
    %v604 = vadd.f32 %v603, %v496
    %v605 = vmax.f32 %v604, 0.0
    %v606 = vpack.c.bf16 %v605, %v605
    %v607 = vld [vmem:[#allocation6] sm:$0xf]
    %v608 = vld [vmem:[#allocation6 + $0x4] sm:$0xf]
    %v609 = vld [vmem:[#allocation6 + $0x8] sm:$0xf]
    %v610 = vld [vmem:[#allocation6 + $0xc] sm:$0xf]
    %v611 = vld [vmem:[#allocation6 + $0x10] sm:$0xf]
    %v612 = vld [vmem:[#allocation6 + $0x14] sm:$0xf]
    %v613 = vld [vmem:[#allocation6 + $0x18] sm:$0xf]
    %v614 = vld [vmem:[#allocation6 + $0x1c] sm:$0xf]
    %v615 = vld [vmem:[#allocation6 + $0x20] sm:$0xf]
    %v616 = vld [vmem:[#allocation6 + $0x24] sm:$0xf]
    %v617 = vld [vmem:[#allocation6 + $0x28] sm:$0xf]
    %v618 = vld [vmem:[#allocation6 + $0x2c] sm:$0xf]
    %v619 = vld [vmem:[#allocation6 + $0x30] sm:$0xf]
    %v620 = vld [vmem:[#allocation6 + $0x34] sm:$0xf]
    %v621 = vld [vmem:[#allocation6 + $0x38] sm:$0xf]
    %v622 = vld [vmem:[#allocation6 + $0x3c] sm:$0xf]
    %v623 = vld [vmem:[%s7] sm:$0x1]
    %v625 = vperm.slane %v623, 0
    %v643 = vunpack.c.l.b16 %v607
    %v644 = vunpack.c.l.b16 %v608
    %v645 = vunpack.c.l.b16 %v609
    %v646 = vunpack.c.l.b16 %v610
    %v647 = vunpack.c.l.b16 %v611
    %v648 = vunpack.c.l.b16 %v612
    %v649 = vunpack.c.l.b16 %v613
    %v650 = vunpack.c.l.b16 %v614
    %v651 = vunpack.c.l.b16 %v615
    %v652 = vunpack.c.l.b16 %v616
    %v653 = vunpack.c.l.b16 %v617
    %v654 = vunpack.c.l.b16 %v618
    %v655 = vunpack.c.l.b16 %v619
    %v656 = vunpack.c.l.b16 %v620
    %v657 = vunpack.c.l.b16 %v621
    %v658 = vunpack.c.l.b16 %v622
    %v659 = vpack.c.b16 %v644, %v643
    %v660 = vpack.c.b16 %v646, %v645
    %v661 = vpack.c.b16 %v648, %v647
    %v662 = vpack.c.b16 %v650, %v649
    %v663 = vpack.c.b16 %v652, %v651
    %v664 = vpack.c.b16 %v654, %v653
    %v665 = vpack.c.b16 %v656, %v655
    %v666 = vpack.c.b16 %v658, %v657
    %675 = vmatpush.bf16.msra.mxu0 %v666
    %676 = vmatpush.bf16.msra.mxu0 %v665
    %677 = vmatpush.bf16.msra.mxu0 %v664
    %678 = vmatpush.bf16.msra.mxu0 %v663
    %679 = vmatpush.bf16.msra.mxu0 %v662
    %680 = vmatpush.bf16.msra.mxu0 %v661
    %681 = vmatpush.bf16.msra.mxu0 %v660
    %682 = vmatpush.bf16.msra.mxu0 %v659
    %683 = vmatmul.bf16.gmra.mxu0 %v606
    %v684 = vpop.f32.mrf.mxu0
    %v685 = vadd.f32 %v625, %v684
    %v686 = vpop.f32.mrf.mxu0
    %687 = vdwg.mxu0
    %vm688 = vcmask 23552
    %689 = vst.msk [vmem:[%s8] sm:$0xff] %vm688, %v685
    // Predicated region
    $region46: #{tpu_custom_call.1} parent=1 // pred_check
      _
    $region47: #{tpu_custom_call.1} parent=1 // pred_check_branch
      %691 = sbr.rel (0) target = $region49
    $region48: #{tpu_custom_call.1} parent=1 // pred_region
      _
    $region49: #{tpu_custom_call.1} parent=1 // pred_fallthru
      _
    // Predicated region
    $region50: #{tpu_custom_call.1} parent=1 // pred_check
      _
    $region51: #{tpu_custom_call.1} parent=1 // pred_check_branch
      %693 = sbr.rel (0) target = $region53
    $region52: #{tpu_custom_call.1} parent=1 // pred_region
      _
    $region53: #{tpu_custom_call.1} parent=1 // pred_fallthru
      _
    %694 = vsyncpa [#allocation3], 1
    %695 = vsyncpa [#allocation5], 1

</llo_original>
